<compile_context>
chip_gen: v7x
topology: tpu7x:2x2x1
jax: 0.10.0
libtpu: 0.0.40
codegen_flags: <defaults>
</compile_context>

<pallas_src>
import functools
import math

import numpy as np

import jax
import jax.numpy as jnp
from jax.experimental import pallas as pl
from jax.experimental.pallas import tpu as pltpu

F32 = jnp.float32

H = 32          # hidden_channels
R = 12          # num_radial
NF = 32         # number of frequencies (freq1)
HALF = H // 2   # 16
QUART = H // 4  # 8

TILE_E = 128    # edges per grid step
TILE_N = 128    # node padding / node-kernel tile

# per-edge packed slab layout (lane-dense, 128 wide)
C_F = 0                 # f                     (H)
C_FREQ = C_F + H        # frequency             (NF)
C_RBF = C_FREQ + NF     # rbf embedding         (R)
C_RB = C_RBF + R        # rbound (cos envelope) (1)
C_GEO = C_RB + 1        # frame: d(3) c(3) v(3) (9)
SLAB_W = 128

_CP_ARB = pltpu.CompilerParams(dimension_semantics=("arbitrary",),
                               vmem_limit_bytes=32 * 1024 * 1024)
_CP_PAR = pltpu.CompilerParams(dimension_semantics=("parallel",),
                               vmem_limit_bytes=32 * 1024 * 1024)


def _round_up(x, m):
    return (x + m - 1) // m * m


def _ln(x):
    mu = jnp.mean(x, axis=-1, keepdims=True)
    xc = x - mu
    var = jnp.mean(xc * xc, axis=-1, keepdims=True)
    return xc * jax.lax.rsqrt(var + 1e-5)


def _silu(x):
    return x * jax.nn.sigmoid(x)


def _full_spec(a):
    nd = a.ndim
    return pl.BlockSpec(a.shape, lambda e, _nd=nd: (0,) * _nd)


# ----------------------------------------------------------------------------
# K0: layer-normed node embeddings  (z_emb, s_nb)
# ----------------------------------------------------------------------------
def _node_embed_kernel(ez_ref, en_ref, zemb_ref, snb_ref):
    zemb_ref[...] = _ln(ez_ref[...])
    snb_ref[...] = _ln(en_ref[...])


def node_embed(emb_rows, nb_rows):
    n_pad = emb_rows.shape[0]
    spec = pl.BlockSpec((TILE_N, H), lambda i: (i, 0))
    return pl.pallas_call(
        _node_embed_kernel,
        grid=(n_pad // TILE_N,),
        in_specs=[spec, spec],
        out_specs=(spec, spec),
        out_shape=(jax.ShapeDtypeStruct((n_pad, H), F32),
                   jax.ShapeDtypeStruct((n_pad, H), F32)),
        compiler_params=_CP_PAR,
    )(emb_rows, nb_rows)


# ----------------------------------------------------------------------------
# K1: edge geometry + rbf + lin1 + NeighborEmb scatter  (slab, s_nodes)
# ----------------------------------------------------------------------------
def _edge_stage1_kernel(src_ref, tgtc_ref, tgtr_ref, valid_ref,
                        pos_ref, snb_ref, zemb_ref,
                        means_ref, betas_ref, freq1_ref,
                        w1a_ref, b1a_ref, w1b_ref, b1b_ref,
                        slab_ref, sacc_ref, *, cutoff, n_pad):
    @pl.when(pl.program_id(0) == 0)
    def _():
        sacc_ref[...] = zemb_ref[...]          # NeighborEmb residual: s starts from z_emb

    src = src_ref[...]                          # (T,1) int32
    tgtc = tgtc_ref[...]                        # (T,1) int32
    tgtr = tgtr_ref[...]                        # (1,T) int32
    te = src.shape[0]

    iota_en = jax.lax.broadcasted_iota(jnp.int32, (te, n_pad), 1)
    oh_i = (iota_en == src).astype(F32)         # gather rows at src
    oh_j = (iota_en == tgtc).astype(F32)        # gather rows at tgt
    iota_ne = jax.lax.broadcasted_iota(jnp.int32, (n_pad, te), 0)
    ohT_j = (iota_ne == tgtr).astype(F32)       # scatter-add at tgt

    pos = pos_ref[...]
    pi_ = jnp.dot(oh_i, pos, preferred_element_type=F32)   # (T,3)
    pj_ = jnp.dot(oh_j, pos, preferred_element_type=F32)

    diff = pi_ - pj_
    radial = jnp.sum(diff * diff, axis=-1, keepdims=True)
    dist = jnp.sqrt(radial)

    ax, ay, az = pi_[:, 0:1], pi_[:, 1:2], pi_[:, 2:3]
    bx, by, bz = pj_[:, 0:1], pj_[:, 1:2], pj_[:, 2:3]
    cx = ay * bz - az * by
    cy = az * bx - ax * bz
    cz = ax * by - ay * bx

    inv_n = 1.0 / (dist + 1e-4)                 # one reciprocal instead of 3 divides
    dx, dy, dz = diff[:, 0:1] * inv_n, diff[:, 1:2] * inv_n, diff[:, 2:3] * inv_n
    inv_c = 1.0 / (jnp.sqrt(cx * cx + cy * cy + cz * cz) + 1e-4)
    cx, cy, cz = cx * inv_c, cy * inv_c, cz * inv_c
    vx = dy * cz - dz * cy
    vy = dz * cx - dx * cz
    vz = dx * cy - dy * cx

    cosb = 0.5 * (jnp.cos(dist * math.pi / cutoff) + 1.0)      # rbounds (no cutoff mask)
    inside = (dist < cutoff).astype(F32)
    rbf = (cosb * inside) * jnp.exp(-betas_ref[...] *
                                    jnp.square(jnp.exp(-dist) - means_ref[...]))  # (T,R)
    freq = jnp.cos(freq1_ref[...] * dist * (1.0 / cutoff))      # (T,NF)

    h1 = jnp.dot(rbf, w1a_ref[...], preferred_element_type=F32) + b1a_ref[...]
    f = jnp.dot(_silu(h1), w1b_ref[...], preferred_element_type=F32) + b1b_ref[...]
    f = f * cosb * valid_ref[...]               # rbounds * lin1(emb); padded edges zeroed

    # NeighborEmb message  f * s_nb[src]  aggregated at tgt
    snb_i = jnp.dot(oh_i, snb_ref[...], preferred_element_type=F32)
    sacc_ref[...] += jnp.dot(ohT_j, f * snb_i, preferred_element_type=F32)

    geo = jnp.concatenate([dx, dy, dz, cx, cy, cz, vx, vy, vz], axis=-1)       # (T,9)
    pad = jnp.zeros((te, SLAB_W - (C_GEO + 9)), F32)
    slab_ref[...] = jnp.concatenate([f, freq, rbf, cosb, geo, pad], axis=-1)   # (T,128)


def edge_stage1(src_col, tgt_col, tgt_row, valid_col, pos_p, s_nb, z_emb,
                means, betas, freq1, w1a, b1a, w1b, b1b, cutoff):
    e_pad = src_col.shape[0]
    n_pad = pos_p.shape[0]
    col = pl.BlockSpec((TILE_E, 1), lambda e: (e, 0))
    row = pl.BlockSpec((1, TILE_E), lambda e: (0, e))
    return pl.pallas_call(
        functools.partial(_edge_stage1_kernel, cutoff=cutoff, n_pad=n_pad),
        grid=(e_pad // TILE_E,),
        in_specs=[col, col, row, col,
                  _full_spec(pos_p), _full_spec(s_nb), _full_spec(z_emb),
                  _full_spec(means), _full_spec(betas), _full_spec(freq1),
                  _full_spec(w1a), _full_spec(b1a), _full_spec(w1b), _full_spec(b1b)],
        out_specs=(pl.BlockSpec((TILE_E, SLAB_W), lambda e: (e, 0)),
                   pl.BlockSpec((n_pad, H), lambda e: (0, 0))),
        out_shape=(jax.ShapeDtypeStruct((e_pad, SLAB_W), F32),
                   jax.ShapeDtypeStruct((n_pad, H), F32)),
        compiler_params=_CP_ARB,
    )(src_col, tgt_col, tgt_row, valid_col, pos_p, s_nb, z_emb,
      means, betas, freq1, w1a, b1a, w1b, b1b)


# ----------------------------------------------------------------------------
# node transform for CFConvS2V:  sv = SiLU(LN(s @ W + b))
# ----------------------------------------------------------------------------
def _s2v_node_kernel(s_ref, w_ref, b_ref, sv_ref):
    h = jnp.dot(s_ref[...], w_ref[...], preferred_element_type=F32) + b_ref[...]
    sv_ref[...] = _silu(_ln(h))


def s2v_node(s_nodes, w, b):
    n_pad = s_nodes.shape[0]
    return pl.pallas_call(
        _s2v_node_kernel,
        grid=(n_pad // TILE_N,),
        in_specs=[pl.BlockSpec((TILE_N, H), lambda i: (i, 0)),
                  _full_spec(w), _full_spec(b)],
        out_specs=pl.BlockSpec((TILE_N, H), lambda i: (i, 0)),
        out_shape=jax.ShapeDtypeStruct((n_pad, H), F32),
        compiler_params=_CP_PAR,
    )(s_nodes, w, b)


# ----------------------------------------------------------------------------
# K2: CFConvS2V equivariant aggregation  ->  NE1 (N, 3H)
# ----------------------------------------------------------------------------
def _edge_stage2_kernel(src_ref, tgtr_ref, slab_ref, sv_ref, ne_ref, *, n_pad):
    @pl.when(pl.program_id(0) == 0)
    def _():
        ne_ref[...] = jnp.zeros_like(ne_ref)

    src = src_ref[...]
    tgtr = tgtr_ref[...]
    te = src.shape[0]
    oh_i = (jax.lax.broadcasted_iota(jnp.int32, (te, n_pad), 1) == src).astype(F32)
    ohT_j = (jax.lax.broadcasted_iota(jnp.int32, (n_pad, te), 0) == tgtr).astype(F32)

    slab = slab_ref[...]
    f = slab[:, C_F:C_F + H]
    m = f * jnp.dot(oh_i, sv_ref[...], preferred_element_type=F32)          # (T,H)
    msg = jnp.concatenate([m * slab[:, C_GEO + 0:C_GEO + 1],
                           m * slab[:, C_GEO + 1:C_GEO + 2],
                           m * slab[:, C_GEO + 2:C_GEO + 3]], axis=-1)      # (T,3H)
    ne_ref[...] += jnp.dot(ohT_j, msg, preferred_element_type=F32)


def edge_stage2(src_col, tgt_row, slab, sv):
    e_pad = src_col.shape[0]
    n_pad = sv.shape[0]
    return pl.pallas_call(
        functools.partial(_edge_stage2_kernel, n_pad=n_pad),
        grid=(e_pad // TILE_E,),
        in_specs=[pl.BlockSpec((TILE_E, 1), lambda e: (e, 0)),
                  pl.BlockSpec((1, TILE_E), lambda e: (0, e)),
                  pl.BlockSpec((TILE_E, SLAB_W), lambda e: (e, 0)),
                  _full_spec(sv)],
        out_specs=pl.BlockSpec((n_pad, 3 * H), lambda e: (0, 0)),
        out_shape=jax.ShapeDtypeStruct((n_pad, 3 * H), F32),
        compiler_params=_CP_ARB,
    )(src_col, tgt_row, slab, sv)


# ----------------------------------------------------------------------------
# K3: scalarization + lin3/lin4/q-k/dir/edge projections -> [edgeweight | edgefeature]
# ----------------------------------------------------------------------------
def _edge_stage3_kernel(src_ref, tgtc_ref, slab_ref, ne_ref,
                        w3bT_ref, b3b_ref, wq_ref, wk_ref,
                        wda_ref, bda_ref, wdb_ref, bdb_ref,
                        web_ref, webT_ref, beb_ref,
                        w3a_ref, b3a_ref, w4a_ref, b4a_ref, w4b_ref, b4b_ref,
                        wea_ref, bea_ref,
                        out_ref, *, n_pad):
    src = src_ref[...]
    tgtc = tgtc_ref[...]
    te = src.shape[0]
    iota_en = jax.lax.broadcasted_iota(jnp.int32, (te, n_pad), 1)
    oh_i = (iota_en == src).astype(F32)
    oh_j = (iota_en == tgtc).astype(F32)

    ne = ne_ref[...]                                            # (N, 3H)
    ne_i = jnp.dot(oh_i, ne, preferred_element_type=F32)        # NE1[i]
    ne_j = jnp.dot(oh_j, ne, preferred_element_type=F32)        # NE1[j]

    slab = slab_ref[...]
    f = slab[:, C_F:C_F + H]
    freq = slab[:, C_FREQ:C_FREQ + NF]
    rbf = slab[:, C_RBF:C_RBF + R]
    rbound = slab[:, C_RB:C_RB + 1]
    geo = slab[:, C_GEO:C_GEO + 9]                              # d(3) c(3) v(3)

    # local-frame scalarization; abs on the cross-frame channel (a == 1)
    def scalarize(nev):
        n0, n1, n2 = nev[:, 0:H], nev[:, H:2 * H], nev[:, 2 * H:3 * H]
        out = []
        for a in range(3):
            acc = (n0 * geo[:, 3 * a + 0:3 * a + 1]
                   + n1 * geo[:, 3 * a + 1:3 * a + 2]
                   + n2 * geo[:, 3 * a + 2:3 * a + 3])
            out.append(jnp.abs(acc) if a == 1 else acc)
        return out

    s1 = scalarize(ne_i)
    s2 = scalarize(ne_j)

    # ---- lin3 (3->16->32) folded with the frequency contraction --------------
    fsum = jnp.sum(freq, axis=-1, keepdims=True)
    fw3 = jnp.dot(freq, w3bT_ref[...], preferred_element_type=F32)     # (T,16)
    fb3 = jnp.sum(freq * b3b_ref[...], axis=-1, keepdims=True)

    def lin3_freq(sa):
        acc = fb3 + fsum * sa[0]
        for m in range(HALF):
            u = (w3a_ref[0, m] * sa[0] + w3a_ref[1, m] * sa[1]
                 + w3a_ref[2, m] * sa[2] + b3a_ref[m])
            acc = acc + _silu(u) * fw3[:, m:m + 1]
        return acc

    scalar3 = lin3_freq(s1)
    scalar4 = lin3_freq(s2)

    # ---- lin4 (3->8->3) + residual, then q/k projections ---------------------
    def lin4_res(sa):
        t = [sa[0] + b4b_ref[0], sa[1] + b4b_ref[1], sa[2] + b4b_ref[2]]
        for m in range(QUART):
            u = (w4a_ref[0, m] * sa[0] + w4a_ref[1, m] * sa[1]
                 + w4a_ref[2, m] * sa[2] + b4a_ref[m])
            x = _silu(u)
            for a in range(3):
                t[a] = t[a] + x * w4b_ref[m, a]
        return t

    t1 = lin4_res(s1)
    t2 = lin4_res(s2)
    aij = jnp.zeros_like(f)
    for a in range(3):
        qa = jnp.dot(t1[a], wq_ref[...], preferred_element_type=F32)
        ka = jnp.dot(t2[a], wk_ref[...], preferred_element_type=F32)
        aij = aij + qa * ka

    # ---- dir_proj on [rb*s3 | rb*s4 | rb*Aij | g | rbf] (split matmul) --------
    wda = wda_ref[...]
    din = (rbound * (jnp.dot(scalar3, wda[0:H, :], preferred_element_type=F32)
                     + jnp.dot(scalar4, wda[H:2 * H, :], preferred_element_type=F32)
                     + jnp.dot(aij, wda[2 * H:3 * H, :], preferred_element_type=F32))
           + jnp.dot(f, wda[3 * H:4 * H, :], preferred_element_type=F32)
           + jnp.dot(rbf, wda[4 * H:4 * H + R, :], preferred_element_type=F32)
           + bda_ref[...])
    d = jnp.dot(_silu(din), wdb_ref[...], preferred_element_type=F32) + bdb_ref[...]
    edgeweight = f * d

    # ---- edge_proj (3 -> 16 -> LN -> SiLU -> 32) + abs(h==1) + freq contract --
    z0, z1, z2 = s1[0] - s2[0], s1[1] - s2[1], s1[2] - s2[2]
    su = jnp.zeros_like(z0)
    sq = jnp.zeros_like(z0)
    for m in range(HALF):
        u = wea_ref[0, m] * z0 + wea_ref[1, m] * z1 + wea_ref[2, m] * z2 + bea_ref[m]
        su = su + u
        sq = sq + u * u
    mean = su * (1.0 / HALF)
    var = sq * (1.0 / HALF) - mean * mean
    inv = jax.lax.rsqrt(var + 1e-5)

    fwe = jnp.dot(freq, webT_ref[...], preferred_element_type=F32)     # (T,16)
    fbe = jnp.sum(freq * beb_ref[...], axis=-1, keepdims=True)
    web = web_ref[...]

    ef_gen = fbe
    ef_h1 = jnp.zeros((te, H), F32)
    for m in range(HALF):
        u = wea_ref[0, m] * z0 + wea_ref[1, m] * z1 + wea_ref[2, m] * z2 + bea_ref[m]
        x = _silu((u - mean) * inv)
        ef_gen = ef_gen + x * fwe[:, m:m + 1]
        ef_h1 = ef_h1 + x[:, 1:2] * web[m:m + 1, :]
    ef_h1 = jnp.abs(ef_h1 + beb_ref[...])                               # abs of h==1 slice
    ef_h1 = jnp.sum(ef_h1 * freq, axis=-1, keepdims=True)
    lane = jax.lax.broadcasted_iota(jnp.int32, ef_gen.shape, 1)
    edgefeature = jnp.where(lane == 1, ef_h1, ef_gen) * rbound

    out_ref[...] = jnp.concatenate([edgeweight, edgefeature], axis=-1)


def edge_stage3(src_col, tgt_col, slab, ne1, p):
    e_pad = src_col.shape[0]
    n_pad = ne1.shape[0]
    col = pl.BlockSpec((TILE_E, 1), lambda e: (e, 0))
    slab_spec = pl.BlockSpec((TILE_E, SLAB_W), lambda e: (e, 0))
    smem = pl.BlockSpec(memory_space=pltpu.MemorySpace.SMEM)

    vmem_args = (p["lin3_b"]["w"].T, p["lin3_b"]["b"].reshape(1, H),
                 p["q_proj"]["w"], p["k_proj"]["w"],
                 p["dir_a"]["w"], p["dir_a"]["b"].reshape(1, H),
                 p["dir_b"]["w"], p["dir_b"]["b"].reshape(1, H),
                 p["edge_b"]["w"], p["edge_b"]["w"].T, p["edge_b"]["b"].reshape(1, H))
    smem_args = (p["lin3_a"]["w"], p["lin3_a"]["b"],
                 p["lin4_a"]["w"], p["lin4_a"]["b"],
                 p["lin4_b"]["w"], p["lin4_b"]["b"],
                 p["edge_a"]["w"], p["edge_a"]["b"])

    return pl.pallas_call(
        functools.partial(_edge_stage3_kernel, n_pad=n_pad),
        grid=(e_pad // TILE_E,),
        in_specs=[col, col, slab_spec, _full_spec(ne1)]
                 + [_full_spec(a) for a in vmem_args]
                 + [smem] * len(smem_args),
        out_specs=pl.BlockSpec((TILE_E, 2 * H), lambda e: (e, 0)),
        out_shape=jax.ShapeDtypeStruct((e_pad, 2 * H), F32),
        compiler_params=_CP_PAR,
    )(src_col, tgt_col, slab, ne1, *vmem_args, *smem_args)


# ----------------------------------------------------------------------------
# TransformerConv layer (value/edge path; aggr='add' + root residual)
# ----------------------------------------------------------------------------
def _interaction_kernel(src_ref, tgtr_ref, ewef_ref, zemb_ref,
                        wv_ref, bv_ref, we_ref,
                        zout_ref, val_ref, *, n_pad):
    @pl.when(pl.program_id(0) == 0)
    def _():
        x = zemb_ref[...]
        h = jnp.dot(x, wv_ref[...], preferred_element_type=F32) + bv_ref[...]
        val_ref[...] = _silu(_ln(h))            # lin_value = Linear -> LN -> SiLU
        zout_ref[...] = x                       # root residual (out += x_r)

    src = src_ref[...]
    tgtr = tgtr_ref[...]
    te = src.shape[0]
    oh_i = (jax.lax.broadcasted_iota(jnp.int32, (te, n_pad), 1) == src).astype(F32)
    ohT_j = (jax.lax.broadcasted_iota(jnp.int32, (n_pad, te), 0) == tgtr).astype(F32)

    ew = ewef_ref[:, 0:H]
    ef = ewef_ref[:, H:2 * H]
    val_i = jnp.dot(oh_i, val_ref[...], preferred_element_type=F32)
    msg = ew * (val_i + jnp.dot(ef, we_ref[...], preferred_element_type=F32))
    zout_ref[...] += jnp.dot(ohT_j, msg, preferred_element_type=F32)


def interaction(src_col, tgt_row, ewef, z_emb, wv, bv, we):
    e_pad = src_col.shape[0]
    n_pad = z_emb.shape[0]
    return pl.pallas_call(
        functools.partial(_interaction_kernel, n_pad=n_pad),
        grid=(e_pad // TILE_E,),
        in_specs=[pl.BlockSpec((TILE_E, 1), lambda e: (e, 0)),
                  pl.BlockSpec((1, TILE_E), lambda e: (0, e)),
                  pl.BlockSpec((TILE_E, 2 * H), lambda e: (e, 0)),
                  _full_spec(z_emb), _full_spec(wv), _full_spec(bv), _full_spec(we)],
        out_specs=pl.BlockSpec((n_pad, H), lambda e: (0, 0)),
        out_shape=jax.ShapeDtypeStruct((n_pad, H), F32),
        scratch_shapes=[pltpu.VMEM((n_pad, H), F32)],
        compiler_params=_CP_ARB,
    )(src_col, tgt_row, ewef, z_emb, wv, bv, we)


# ----------------------------------------------------------------------------
# readout: sc = LN(z_emb) @ W_mlp + emblinfinal[z], pooled per graph
# ----------------------------------------------------------------------------
def _readout_kernel(batchr_ref, zemb_ref, embf_ref, wmlp_ref, out_ref, *, num_graphs):
    @pl.when(pl.program_id(0) == 0)
    def _():
        out_ref[...] = jnp.zeros_like(out_ref)

    x = _ln(zemb_ref[...])
    sc = jnp.dot(x, wmlp_ref[...], preferred_element_type=F32) + embf_ref[...]
    tn = x.shape[0]
    pool = (jax.lax.broadcasted_iota(jnp.int32, (num_graphs, tn), 0)
            == batchr_ref[...]).astype(F32)
    out_ref[...] += jnp.dot(pool, sc, preferred_element_type=F32)


def readout(batch_row, z_emb, embf_rows, wmlp, num_graphs):
    n_pad = z_emb.shape[0]
    return pl.pallas_call(
        functools.partial(_readout_kernel, num_graphs=num_graphs),
        grid=(n_pad // TILE_N,),
        in_specs=[pl.BlockSpec((1, TILE_N), lambda i: (0, i)),
                  pl.BlockSpec((TILE_N, H), lambda i: (i, 0)),
                  pl.BlockSpec((TILE_N, 1), lambda i: (i, 0)),
                  _full_spec(wmlp)],
        out_specs=pl.BlockSpec((num_graphs, 1), lambda i: (0, 0)),
        out_shape=jax.ShapeDtypeStruct((num_graphs, 1), F32),
        compiler_params=_CP_ARB,
    )(batch_row, z_emb, embf_rows, wmlp)


# ----------------------------------------------------------------------------
# Deterministic parameter construction (shapes follow ClofNet.__init__)
# ----------------------------------------------------------------------------
def init_params(key, hid, num_radial, num_layers, cutoff):
    assert hid == H and num_radial == R
    kit = iter(jax.random.split(key, 128))

    def lin(din, dout, bias=True):
        w = (jax.random.normal(next(kit), (din, dout), F32) / np.sqrt(din)).astype(F32)
        b = (jax.random.normal(next(kit), (dout,), F32) * 0.01) if bias else None
        return {"w": w, "b": b}

    p = {}
    p["emblin"] = jax.random.uniform(next(kit), (95, hid), F32, -math.sqrt(3), math.sqrt(3))
    p["nb_emb"] = jax.random.uniform(next(kit), (95, hid), F32, -math.sqrt(3), math.sqrt(3))
    p["emblinfinal"] = jax.random.normal(next(kit), (95, 1), F32) * 0.1

    start, end = math.exp(-cutoff), math.exp(-0.0)
    p["means"] = jnp.linspace(start, end, num_radial).astype(F32)
    p["betas"] = jnp.full((num_radial,), (2.0 / num_radial * (end - start)) ** (-2), F32)
    p["freq1"] = jnp.arange(NF, dtype=F32) * math.pi

    p["s2v_lin"] = lin(hid, hid)
    p["lin1_a"], p["lin1_b"] = lin(num_radial, hid), lin(hid, hid)
    p["lin3_a"], p["lin3_b"] = lin(3, hid // 2), lin(hid // 2, 32)
    p["lin4_a"], p["lin4_b"] = lin(3, hid // 4), lin(hid // 4, 3)
    p["q_proj"], p["k_proj"] = lin(hid, hid, bias=False), lin(hid, hid, bias=False)
    p["dir_a"], p["dir_b"] = lin(4 * hid + num_radial, hid), lin(hid, hid)
    p["edge_a"], p["edge_b"] = lin(3, hid // 2), lin(hid // 2, 32)
    p["mlp"] = lin(hid, 1, bias=False)
    p["interactions"] = [{"value": lin(hid, hid), "edge": lin(hid, hid, bias=False)}
                         for _ in range(num_layers)]
    return p


# ----------------------------------------------------------------------------
# ClofNet forward
# ----------------------------------------------------------------------------
def clofnet_forward(p, z, pos, edge_src, edge_tgt, batch, num_graphs, cutoff):
    n = z.shape[0]
    e = edge_src.shape[0]
    n_pad = _round_up(max(n, 1), TILE_N)
    e_pad = _round_up(max(e, 1), TILE_E)

    # ---- padding / layout glue (plain JAX) ----
    z_p = jnp.concatenate([z.astype(jnp.int32), jnp.zeros((n_pad - n,), jnp.int32)])
    pos_p = jnp.concatenate([pos.astype(F32), jnp.zeros((n_pad - n, 3), F32)], axis=0)
    batch_p = jnp.concatenate([batch.astype(jnp.int32),
                               jnp.full((n_pad - n,), num_graphs, jnp.int32)])
    src_p = jnp.concatenate([edge_src.astype(jnp.int32), jnp.zeros((e_pad - e,), jnp.int32)])
    tgt_p = jnp.concatenate([edge_tgt.astype(jnp.int32), jnp.zeros((e_pad - e,), jnp.int32)])
    valid = jnp.concatenate([jnp.ones((e,), F32), jnp.zeros((e_pad - e,), F32)])

    src_col = src_p.reshape(e_pad, 1)
    tgt_col = tgt_p.reshape(e_pad, 1)
    tgt_row = tgt_p.reshape(1, e_pad)
    valid_col = valid.reshape(e_pad, 1)
    batch_row = batch_p.reshape(1, n_pad)

    # exact embedding-table lookups (plain-JAX gathers)
    emb_rows = p["emblin"][z_p]
    nb_rows = p["nb_emb"][z_p]
    embf_rows = p["emblinfinal"][z_p]

    # K0: layer-normed node embeddings
    z_emb, s_nb = node_embed(emb_rows, nb_rows)

    # K1: fused edge geometry + rbf + lin1 + NeighborEmb aggregation
    slab, s_nodes = edge_stage1(
        src_col, tgt_col, tgt_row, valid_col, pos_p, s_nb, z_emb,
        p["means"].reshape(1, R), p["betas"].reshape(1, R), p["freq1"].reshape(1, NF),
        p["lin1_a"]["w"], p["lin1_a"]["b"].reshape(1, H),
        p["lin1_b"]["w"], p["lin1_b"]["b"].reshape(1, H), cutoff)

    # node transform for CFConvS2V
    sv = s2v_node(s_nodes, p["s2v_lin"]["w"], p["s2v_lin"]["b"].reshape(1, H))

    # K2: CFConvS2V equivariant aggregation -> NE1 (N, 3H)
    ne1 = edge_stage2(src_col, tgt_row, slab, sv)

    # K3: scalarization + lin3/lin4/q-k/dir/edge -> [edgeweight | edgefeature]
    ewef = edge_stage3(src_col, tgt_col, slab, ne1, p)

    # TransformerConv layers (softmax attention weights are unused by the reference output)
    x = z_emb
    for lp in p["interactions"]:
        x = interaction(src_col, tgt_row, ewef, x,
                        lp["value"]["w"], lp["value"]["b"].reshape(1, H),
                        lp["edge"]["w"])

    # readout + global_add_pool
    return readout(batch_row, x, embf_rows, p["mlp"]["w"], num_graphs)


# ----------------------------------------------------------------------------
# Main
# ----------------------------------------------------------------------------
if __name__ == "__main__":
    HID, NUM_RADIAL, NUM_LAYERS, CUTOFF = 32, 12, 2, 5.0
    N_PER_GRAPH, NUM_GRAPHS = 4, 2
    N = N_PER_GRAPH * NUM_GRAPHS

    key = jax.random.PRNGKey(0)
    kparam, kz, kpos = jax.random.split(key, 3)

    z = jax.random.randint(kz, (N,), 1, 10)                     # atomic numbers
    pos = jax.random.normal(kpos, (N, 3), F32) * 0.6            # coordinates inside cutoff
    batch = jnp.repeat(jnp.arange(NUM_GRAPHS, dtype=jnp.int32), N_PER_GRAPH)

    # radius_graph built on the host (dynamic edge count has no clean Pallas equivalent).
    pos_np = np.asarray(pos)
    batch_np = np.asarray(batch)
    src, tgt = [], []
    for a in range(N):
        for b in range(N):
            if a == b or batch_np[a] != batch_np[b]:
                continue
            if np.linalg.norm(pos_np[a] - pos_np[b]) < CUTOFF:
                src.append(a)
                tgt.append(b)
    assert len(src) > 0
    edge_src = jnp.asarray(src, dtype=jnp.int32)   # edge_index[0]  ('i' in ClofNet.forward)
    edge_tgt = jnp.asarray(tgt, dtype=jnp.int32)   # edge_index[1]  ('j' in ClofNet.forward)

    params = init_params(kparam, HID, NUM_RADIAL, NUM_LAYERS, CUTOFF)

    out = clofnet_forward(params, z, pos, edge_src, edge_tgt, batch, NUM_GRAPHS, CUTOFF)
    out = jax.block_until_ready(out)

    assert out.shape == (NUM_GRAPHS, 1)
    assert bool(jnp.all(jnp.isfinite(out)))
    print("KERNEL_OK")
</pallas_src>

<mosaic_0001>
module attributes {stable_mosaic.version = 11 : i64} {
  func.func @_node_embed_kernel(%arg0: i32, %arg1: memref<128x32xf32, #tpu.memory_space<vmem>>, %arg2: memref<128x32xf32, #tpu.memory_space<vmem>>, %arg3: memref<128x32xf32, #tpu.memory_space<vmem>>, %arg4: memref<128x32xf32, #tpu.memory_space<vmem>>) attributes {dimension_semantics = [#tpu.dimension_semantics<parallel>], iteration_bounds = array<i64: 1>, scalar_prefetch = 0 : i64, scratch_operands = 0 : i64, tpu.core_type = #tpu.core_type<tc>, window_params = [{transform_indices = @transform_0, window_bounds = array<i64: 128, 32>}, {transform_indices = @transform_1, window_bounds = array<i64: 128, 32>}, {transform_indices = @transform_2, window_bounds = array<i64: 128, 32>}, {transform_indices = @transform_3, window_bounds = array<i64: 128, 32>}]} {
    %c0 = arith.constant 0 : index
    %c0_0 = arith.constant 0 : index
    %0 = vector.load %arg1[%c0, %c0_0] : memref<128x32xf32, #tpu.memory_space<vmem>>, vector<128x32xf32>
    %cst = arith.constant dense<0.000000e+00> : vector<128xf32>
    %1 = vector.multi_reduction <add>, %0, %cst [1] : vector<128x32xf32> to vector<128xf32>
    %2 = vector.shape_cast %1 : vector<128xf32> to vector<128x1xf32>
    %cst_1 = arith.constant 3.200000e+01 : f32
    %3 = vector.broadcast %cst_1 : f32 to vector<128x1xf32>
    %4 = arith.divf %2, %3 : vector<128x1xf32>
    %5 = vector.broadcast %4 : vector<128x1xf32> to vector<128x32xf32>
    %6 = arith.subf %0, %5 : vector<128x32xf32>
    %7 = arith.mulf %6, %6 : vector<128x32xf32>
    %cst_2 = arith.constant dense<0.000000e+00> : vector<128xf32>
    %8 = vector.multi_reduction <add>, %7, %cst_2 [1] : vector<128x32xf32> to vector<128xf32>
    %9 = vector.shape_cast %8 : vector<128xf32> to vector<128x1xf32>
    %cst_3 = arith.constant 3.200000e+01 : f32
    %10 = vector.broadcast %cst_3 : f32 to vector<128x1xf32>
    %11 = arith.divf %9, %10 : vector<128x1xf32>
    %cst_4 = arith.constant 9.99999974E-6 : f32
    %12 = vector.broadcast %cst_4 : f32 to vector<128x1xf32>
    %13 = arith.addf %11, %12 : vector<128x1xf32>
    %14 = math.rsqrt %13 : vector<128x1xf32>
    %15 = vector.broadcast %14 : vector<128x1xf32> to vector<128x32xf32>
    %16 = arith.mulf %6, %15 : vector<128x32xf32>
    %c0_5 = arith.constant 0 : index
    %c0_6 = arith.constant 0 : index
    %17 = vector.load %arg3[%c0_5, %c0_6] : memref<128x32xf32, #tpu.memory_space<vmem>>, vector<128x32xf32>
    tpu.vector_store %arg3[%c0_5, %c0_6], %16 {strides = array<i32>} : memref<128x32xf32, #tpu.memory_space<vmem>>, vector<128x32xf32>,
    %c0_7 = arith.constant 0 : index
    %c0_8 = arith.constant 0 : index
    %18 = vector.load %arg2[%c0_7, %c0_8] : memref<128x32xf32, #tpu.memory_space<vmem>>, vector<128x32xf32>
    %cst_9 = arith.constant dense<0.000000e+00> : vector<128xf32>
    %19 = vector.multi_reduction <add>, %18, %cst_9 [1] : vector<128x32xf32> to vector<128xf32>
    %20 = vector.shape_cast %19 : vector<128xf32> to vector<128x1xf32>
    %cst_10 = arith.constant 3.200000e+01 : f32
    %21 = vector.broadcast %cst_10 : f32 to vector<128x1xf32>
    %22 = arith.divf %20, %21 : vector<128x1xf32>
    %23 = vector.broadcast %22 : vector<128x1xf32> to vector<128x32xf32>
    %24 = arith.subf %18, %23 : vector<128x32xf32>
    %25 = arith.mulf %24, %24 : vector<128x32xf32>
    %cst_11 = arith.constant dense<0.000000e+00> : vector<128xf32>
    %26 = vector.multi_reduction <add>, %25, %cst_11 [1] : vector<128x32xf32> to vector<128xf32>
    %27 = vector.shape_cast %26 : vector<128xf32> to vector<128x1xf32>
    %cst_12 = arith.constant 3.200000e+01 : f32
    %28 = vector.broadcast %cst_12 : f32 to vector<128x1xf32>
    %29 = arith.divf %27, %28 : vector<128x1xf32>
    %cst_13 = arith.constant 9.99999974E-6 : f32
    %30 = vector.broadcast %cst_13 : f32 to vector<128x1xf32>
    %31 = arith.addf %29, %30 : vector<128x1xf32>
    %32 = math.rsqrt %31 : vector<128x1xf32>
    %33 = vector.broadcast %32 : vector<128x1xf32> to vector<128x32xf32>
    %34 = arith.mulf %24, %33 : vector<128x32xf32>
    %c0_14 = arith.constant 0 : index
    %c0_15 = arith.constant 0 : index
    %35 = vector.load %arg4[%c0_14, %c0_15] : memref<128x32xf32, #tpu.memory_space<vmem>>, vector<128x32xf32>
    tpu.vector_store %arg4[%c0_14, %c0_15], %34 {strides = array<i32>} : memref<128x32xf32, #tpu.memory_space<vmem>>, vector<128x32xf32>,
    return
  }
  func.func @transform_0(%arg0: i32) -> (i32, i32) {
    %c0_i32 = arith.constant 0 : i32
    %c0_i32_0 = arith.constant 0 : i32
    return %arg0, %c0_i32 : i32, i32
  }
  func.func @transform_1(%arg0: i32) -> (i32, i32) {
    %c0_i32 = arith.constant 0 : i32
    %c0_i32_0 = arith.constant 0 : i32
    return %arg0, %c0_i32 : i32, i32
  }
  func.func @transform_2(%arg0: i32) -> (i32, i32) {
    %c0_i32 = arith.constant 0 : i32
    %c0_i32_0 = arith.constant 0 : i32
    return %arg0, %c0_i32 : i32, i32
  }
  func.func @transform_3(%arg0: i32) -> (i32, i32) {
    %c0_i32 = arith.constant 0 : i32
    %c0_i32_0 = arith.constant 0 : i32
    return %arg0, %c0_i32 : i32, i32
  }
}

</mosaic_0001>

<llo_original>
// kernel: tpu_custom_call.1
$region0: #{tpu_custom_call.1}
  #allocation0 [shape = 'u32[]', space=smem, size = 0x4, offset = 0x4, fixed_abs, tag = 'smem constant byte address 0x4 - core index']
  #allocation1 [shape = 'u32[144,128]{1,0:T(1,128)}', space=vmem, size = 0x12000, scoped, tag = 'internal scratch']
  %s0 = inlined_call_operand.vmem [shape: f32[128,32], index: 0, kind: input, shape index: {}]
  %s1 = inlined_call_operand.vmem [shape: f32[128,32], index: 1, kind: input, shape index: {}]
  %s2 = inlined_call_operand.vmem [shape: f32[128,32], index: 2, kind: output, shape index: {0}]
  %s3 = inlined_call_operand.vmem [shape: f32[128,32], index: 3, kind: output, shape index: {1}]
  %4 = xla_tuple %s2, %s3
  %s5 = sld [smem:[#allocation0]]
  $region26: #{tpu_custom_call.1} parent=0
    _
  %s7 = ssub.s32 1, %s5
  %s8 = scalar_select 0, %s7, %s5
  // Predicated region
  $region2: #{tpu_custom_call.1} parent=0 // pred_check
    _
  $region3: #{tpu_custom_call.1} parent=0 // pred_check_branch
    %10 = sbr.rel (0) target = $region5
  $region4: #{tpu_custom_call.1} parent=0 // pred_region
    _
  $region5: #{tpu_custom_call.1} parent=0 // pred_fallthru
    _
  // Predicated region
  $region6: #{tpu_custom_call.1} parent=0 // pred_check
    _
  $region7: #{tpu_custom_call.1} parent=0 // pred_check_branch
    %12 = sbr.rel (0) target = $region9
  $region8: #{tpu_custom_call.1} parent=0 // pred_region
    _
  $region9: #{tpu_custom_call.1} parent=0 // pred_fallthru
    _
  %v13 = vld [vmem:[%s0] sm:$0xff]
  %v14 = vld [vmem:[%s0 + $0x8] sm:$0xff]
  %v15 = vld [vmem:[%s0 + $0x10] sm:$0xff]
  %v16 = vld [vmem:[%s0 + $0x18] sm:$0xff]
  %v17 = vld [vmem:[%s0 + $0x20] sm:$0xff]
  %v18 = vld [vmem:[%s0 + $0x28] sm:$0xff]
  %v19 = vld [vmem:[%s0 + $0x30] sm:$0xff]
  %v20 = vld [vmem:[%s0 + $0x38] sm:$0xff]
  %v21 = vld [vmem:[%s0 + $0x40] sm:$0xff]
  %v22 = vld [vmem:[%s0 + $0x48] sm:$0xff]
  %v23 = vld [vmem:[%s0 + $0x50] sm:$0xff]
  %v24 = vld [vmem:[%s0 + $0x58] sm:$0xff]
  %v25 = vld [vmem:[%s0 + $0x60] sm:$0xff]
  %v26 = vld [vmem:[%s0 + $0x68] sm:$0xff]
  %v27 = vld [vmem:[%s0 + $0x70] sm:$0xff]
  %v28 = vld [vmem:[%s0 + $0x78] sm:$0xff]
  %vm29 = vcmask 261120
  %v30 = vsel %vm29, %v13, 0.0
  %31 = vadd.xlane.f32.xlu0 %v30
  %v32 = vpop.xlane.xlu0 %31
  %v33 = vsel %vm29, %v14, 0.0
  %34 = vadd.xlane.f32.xlu0 %v33
  %v35 = vpop.xlane.xlu0 %34
  %v36 = vsel %vm29, %v15, 0.0
  %37 = vadd.xlane.f32.xlu0 %v36
  %v38 = vpop.xlane.xlu0 %37
  %v39 = vsel %vm29, %v16, 0.0
  %40 = vadd.xlane.f32.xlu0 %v39
  %v41 = vpop.xlane.xlu0 %40
  %v42 = vsel %vm29, %v17, 0.0
  %43 = vadd.xlane.f32.xlu0 %v42
  %v44 = vpop.xlane.xlu0 %43
  %v45 = vsel %vm29, %v18, 0.0
  %46 = vadd.xlane.f32.xlu0 %v45
  %v47 = vpop.xlane.xlu0 %46
  %v48 = vsel %vm29, %v19, 0.0
  %49 = vadd.xlane.f32.xlu0 %v48
  %v50 = vpop.xlane.xlu0 %49
  %v51 = vsel %vm29, %v20, 0.0
  %52 = vadd.xlane.f32.xlu0 %v51
  %v53 = vpop.xlane.xlu0 %52
  %v54 = vsel %vm29, %v21, 0.0
  %55 = vadd.xlane.f32.xlu0 %v54
  %v56 = vpop.xlane.xlu0 %55
  %v57 = vsel %vm29, %v22, 0.0
  %58 = vadd.xlane.f32.xlu0 %v57
  %v59 = vpop.xlane.xlu0 %58
  %v60 = vsel %vm29, %v23, 0.0
  %61 = vadd.xlane.f32.xlu0 %v60
  %v62 = vpop.xlane.xlu0 %61
  %v63 = vsel %vm29, %v24, 0.0
  %64 = vadd.xlane.f32.xlu0 %v63
  %v65 = vpop.xlane.xlu0 %64
  %v66 = vsel %vm29, %v25, 0.0
  %67 = vadd.xlane.f32.xlu0 %v66
  %v68 = vpop.xlane.xlu0 %67
  %v69 = vsel %vm29, %v26, 0.0
  %70 = vadd.xlane.f32.xlu0 %v69
  %v71 = vpop.xlane.xlu0 %70
  %v72 = vsel %vm29, %v27, 0.0
  %73 = vadd.xlane.f32.xlu0 %v72
  %v74 = vpop.xlane.xlu0 %73
  %v75 = vsel %vm29, %v28, 0.0
  %76 = vadd.xlane.f32.xlu0 %v75
  %v77 = vpop.xlane.xlu0 %76
  %v78 = vrcp.pop 32.0
  %v79 = vmul.f32 %v32, %v78
  %v80 = vmul.f32 %v35, %v78
  %v81 = vmul.f32 %v38, %v78
  %v82 = vmul.f32 %v41, %v78
  %v83 = vmul.f32 %v44, %v78
  %v84 = vmul.f32 %v47, %v78
  %v85 = vmul.f32 %v50, %v78
  %v86 = vmul.f32 %v53, %v78
  %v87 = vmul.f32 %v56, %v78
  %v88 = vmul.f32 %v59, %v78
  %v89 = vmul.f32 %v62, %v78
  %v90 = vmul.f32 %v65, %v78
  %v91 = vmul.f32 %v68, %v78
  %v92 = vmul.f32 %v71, %v78
  %v93 = vmul.f32 %v74, %v78
  %v94 = vmul.f32 %v77, %v78
  %v95 = vsub.f32 %v13, %v79
  %v96 = vsub.f32 %v14, %v80
  %v97 = vsub.f32 %v15, %v81
  %v98 = vsub.f32 %v16, %v82
  %v99 = vsub.f32 %v17, %v83
  %v100 = vsub.f32 %v18, %v84
  %v101 = vsub.f32 %v19, %v85
  %v102 = vsub.f32 %v20, %v86
  %v103 = vsub.f32 %v21, %v87
  %v104 = vsub.f32 %v22, %v88
  %v105 = vsub.f32 %v23, %v89
  %v106 = vsub.f32 %v24, %v90
  %v107 = vsub.f32 %v25, %v91
  %v108 = vsub.f32 %v26, %v92
  %v109 = vsub.f32 %v27, %v93
  %v110 = vsub.f32 %v28, %v94
  %v111 = vmul.f32 %v95, %v95
  %v112 = vmul.f32 %v96, %v96
  %v113 = vmul.f32 %v97, %v97
  %v114 = vmul.f32 %v98, %v98
  %v115 = vmul.f32 %v99, %v99
  %v116 = vmul.f32 %v100, %v100
  %v117 = vmul.f32 %v101, %v101
  %v118 = vmul.f32 %v102, %v102
  %v119 = vmul.f32 %v103, %v103
  %v120 = vmul.f32 %v104, %v104
  %v121 = vmul.f32 %v105, %v105
  %v122 = vmul.f32 %v106, %v106
  %v123 = vmul.f32 %v107, %v107
  %v124 = vmul.f32 %v108, %v108
  %v125 = vmul.f32 %v109, %v109
  %v126 = vmul.f32 %v110, %v110
  %v127 = vsel %vm29, %v111, 0.0
  %128 = vadd.xlane.f32.xlu0 %v127
  %v129 = vpop.xlane.xlu0 %128
  %v130 = vsel %vm29, %v112, 0.0
  %131 = vadd.xlane.f32.xlu0 %v130
  %v132 = vpop.xlane.xlu0 %131
  %v133 = vsel %vm29, %v113, 0.0
  %134 = vadd.xlane.f32.xlu0 %v133
  %v135 = vpop.xlane.xlu0 %134
  %v136 = vsel %vm29, %v114, 0.0
  %137 = vadd.xlane.f32.xlu0 %v136
  %v138 = vpop.xlane.xlu0 %137
  %v139 = vsel %vm29, %v115, 0.0
  %140 = vadd.xlane.f32.xlu0 %v139
  %v141 = vpop.xlane.xlu0 %140
  %v142 = vsel %vm29, %v116, 0.0
  %143 = vadd.xlane.f32.xlu0 %v142
  %v144 = vpop.xlane.xlu0 %143
  %v145 = vsel %vm29, %v117, 0.0
  %146 = vadd.xlane.f32.xlu0 %v145
  %v147 = vpop.xlane.xlu0 %146
  %v148 = vsel %vm29, %v118, 0.0
  %149 = vadd.xlane.f32.xlu0 %v148
  %v150 = vpop.xlane.xlu0 %149
  %v151 = vsel %vm29, %v119, 0.0
  %152 = vadd.xlane.f32.xlu0 %v151
  %v153 = vpop.xlane.xlu0 %152
  %v154 = vsel %vm29, %v120, 0.0
  %155 = vadd.xlane.f32.xlu0 %v154
  %v156 = vpop.xlane.xlu0 %155
  %v157 = vsel %vm29, %v121, 0.0
  %158 = vadd.xlane.f32.xlu0 %v157
  %v159 = vpop.xlane.xlu0 %158
  %v160 = vsel %vm29, %v122, 0.0
  %161 = vadd.xlane.f32.xlu0 %v160
  %v162 = vpop.xlane.xlu0 %161
  %v163 = vsel %vm29, %v123, 0.0
  %164 = vadd.xlane.f32.xlu0 %v163
  %v165 = vpop.xlane.xlu0 %164
  %v166 = vsel %vm29, %v124, 0.0
  %167 = vadd.xlane.f32.xlu0 %v166
  %v168 = vpop.xlane.xlu0 %167
  %v169 = vsel %vm29, %v125, 0.0
  %170 = vadd.xlane.f32.xlu0 %v169
  %v171 = vpop.xlane.xlu0 %170
  %v172 = vsel %vm29, %v126, 0.0
  %173 = vadd.xlane.f32.xlu0 %v172
  %v174 = vpop.xlane.xlu0 %173
  %v175 = vmul.f32 %v129, %v78
  %v176 = vmul.f32 %v132, %v78
  %v177 = vmul.f32 %v135, %v78
  %v178 = vmul.f32 %v138, %v78
  %v179 = vmul.f32 %v141, %v78
  %v180 = vmul.f32 %v144, %v78
  %v181 = vmul.f32 %v147, %v78
  %v182 = vmul.f32 %v150, %v78
  %v183 = vmul.f32 %v153, %v78
  %v184 = vmul.f32 %v156, %v78
  %v185 = vmul.f32 %v159, %v78
  %v186 = vmul.f32 %v162, %v78
  %v187 = vmul.f32 %v165, %v78
  %v188 = vmul.f32 %v168, %v78
  %v189 = vmul.f32 %v171, %v78
  %v190 = vmul.f32 %v174, %v78
  %v191 = vadd.f32 %v175, 1e-05
  %v192 = vadd.f32 %v176, 1e-05
  %v193 = vadd.f32 %v177, 1e-05
  %v194 = vadd.f32 %v178, 1e-05
  %v195 = vadd.f32 %v179, 1e-05
  %v196 = vadd.f32 %v180, 1e-05
  %v197 = vadd.f32 %v181, 1e-05
  %v198 = vadd.f32 %v182, 1e-05
  %v199 = vadd.f32 %v183, 1e-05
  %v200 = vadd.f32 %v184, 1e-05
  %v201 = vadd.f32 %v185, 1e-05
  %v202 = vadd.f32 %v186, 1e-05
  %v203 = vadd.f32 %v187, 1e-05
  %v204 = vadd.f32 %v188, 1e-05
  %v205 = vadd.f32 %v189, 1e-05
  %v206 = vadd.f32 %v190, 1e-05
  %v207 = vrsqrt.pop %v191
  %v208 = vrsqrt.pop %v192
  %v209 = vrsqrt.pop %v193
  %v210 = vrsqrt.pop %v194
  %v211 = vrsqrt.pop %v195
  %v212 = vrsqrt.pop %v196
  %v213 = vrsqrt.pop %v197
  %v214 = vrsqrt.pop %v198
  %v215 = vrsqrt.pop %v199
  %v216 = vrsqrt.pop %v200
  %v217 = vrsqrt.pop %v201
  %v218 = vrsqrt.pop %v202
  %v219 = vrsqrt.pop %v203
  %v220 = vrsqrt.pop %v204
  %v221 = vrsqrt.pop %v205
  %v222 = vrsqrt.pop %v206
  %v223 = vmul.f32 %v95, %v207
  %v224 = vmul.f32 %v96, %v208
  %v225 = vmul.f32 %v97, %v209
  %v226 = vmul.f32 %v98, %v210
  %v227 = vmul.f32 %v99, %v211
  %v228 = vmul.f32 %v100, %v212
  %v229 = vmul.f32 %v101, %v213
  %v230 = vmul.f32 %v102, %v214
  %v231 = vmul.f32 %v103, %v215
  %v232 = vmul.f32 %v104, %v216
  %v233 = vmul.f32 %v105, %v217
  %v234 = vmul.f32 %v106, %v218
  %v235 = vmul.f32 %v107, %v219
  %v236 = vmul.f32 %v108, %v220
  %v237 = vmul.f32 %v109, %v221
  %v238 = vmul.f32 %v110, %v222
  %239 = vst.msk [vmem:[%s2] sm:$0xff] %vm29, %v223
  %240 = vst.msk [vmem:[%s2 + $0x8] sm:$0xff] %vm29, %v224
  %241 = vst.msk [vmem:[%s2 + $0x10] sm:$0xff] %vm29, %v225
  %242 = vst.msk [vmem:[%s2 + $0x18] sm:$0xff] %vm29, %v226
  %243 = vst.msk [vmem:[%s2 + $0x20] sm:$0xff] %vm29, %v227
  %244 = vst.msk [vmem:[%s2 + $0x28] sm:$0xff] %vm29, %v228
  %245 = vst.msk [vmem:[%s2 + $0x30] sm:$0xff] %vm29, %v229
  %246 = vst.msk [vmem:[%s2 + $0x38] sm:$0xff] %vm29, %v230
  %247 = vst.msk [vmem:[%s2 + $0x40] sm:$0xff] %vm29, %v231
  %248 = vst.msk [vmem:[%s2 + $0x48] sm:$0xff] %vm29, %v232
  %249 = vst.msk [vmem:[%s2 + $0x50] sm:$0xff] %vm29, %v233
  %250 = vst.msk [vmem:[%s2 + $0x58] sm:$0xff] %vm29, %v234
  %251 = vst.msk [vmem:[%s2 + $0x60] sm:$0xff] %vm29, %v235
  %252 = vst.msk [vmem:[%s2 + $0x68] sm:$0xff] %vm29, %v236
  %253 = vst.msk [vmem:[%s2 + $0x70] sm:$0xff] %vm29, %v237
  %254 = vst.msk [vmem:[%s2 + $0x78] sm:$0xff] %vm29, %v238
  %v255 = vld [vmem:[%s1] sm:$0xff]
  %v256 = vld [vmem:[%s1 + $0x8] sm:$0xff]
  %v257 = vld [vmem:[%s1 + $0x10] sm:$0xff]
  %v258 = vld [vmem:[%s1 + $0x18] sm:$0xff]
  %v259 = vld [vmem:[%s1 + $0x20] sm:$0xff]
  %v260 = vld [vmem:[%s1 + $0x28] sm:$0xff]
  %v261 = vld [vmem:[%s1 + $0x30] sm:$0xff]
  %v262 = vld [vmem:[%s1 + $0x38] sm:$0xff]
  %v263 = vld [vmem:[%s1 + $0x40] sm:$0xff]
  %v264 = vld [vmem:[%s1 + $0x48] sm:$0xff]
  %v265 = vld [vmem:[%s1 + $0x50] sm:$0xff]
  %v266 = vld [vmem:[%s1 + $0x58] sm:$0xff]
  %v267 = vld [vmem:[%s1 + $0x60] sm:$0xff]
  %v268 = vld [vmem:[%s1 + $0x68] sm:$0xff]
  %v269 = vld [vmem:[%s1 + $0x70] sm:$0xff]
  %v270 = vld [vmem:[%s1 + $0x78] sm:$0xff]
  %v271 = vsel %vm29, %v255, 0.0
  %272 = vadd.xlane.f32.xlu0 %v271
  %v273 = vpop.xlane.xlu0 %272
  %v274 = vsel %vm29, %v256, 0.0
  %275 = vadd.xlane.f32.xlu0 %v274
  %v276 = vpop.xlane.xlu0 %275
  %v277 = vsel %vm29, %v257, 0.0
  %278 = vadd.xlane.f32.xlu0 %v277
  %v279 = vpop.xlane.xlu0 %278
  %v280 = vsel %vm29, %v258, 0.0
  %281 = vadd.xlane.f32.xlu0 %v280
  %v282 = vpop.xlane.xlu0 %281
  %v283 = vsel %vm29, %v259, 0.0
  %284 = vadd.xlane.f32.xlu0 %v283
  %v285 = vpop.xlane.xlu0 %284
  %v286 = vsel %vm29, %v260, 0.0
  %287 = vadd.xlane.f32.xlu0 %v286
  %v288 = vpop.xlane.xlu0 %287
  %v289 = vsel %vm29, %v261, 0.0
  %290 = vadd.xlane.f32.xlu0 %v289
  %v291 = vpop.xlane.xlu0 %290
  %v292 = vsel %vm29, %v262, 0.0
  %293 = vadd.xlane.f32.xlu0 %v292
  %v294 = vpop.xlane.xlu0 %293
  %v295 = vsel %vm29, %v263, 0.0
  %296 = vadd.xlane.f32.xlu0 %v295
  %v297 = vpop.xlane.xlu0 %296
  %v298 = vsel %vm29, %v264, 0.0
  %299 = vadd.xlane.f32.xlu0 %v298
  %v300 = vpop.xlane.xlu0 %299
  %v301 = vsel %vm29, %v265, 0.0
  %302 = vadd.xlane.f32.xlu0 %v301
  %v303 = vpop.xlane.xlu0 %302
  %v304 = vsel %vm29, %v266, 0.0
  %305 = vadd.xlane.f32.xlu0 %v304
  %v306 = vpop.xlane.xlu0 %305
  %v307 = vsel %vm29, %v267, 0.0
  %308 = vadd.xlane.f32.xlu0 %v307
  %v309 = vpop.xlane.xlu0 %308
  %v310 = vsel %vm29, %v268, 0.0
  %311 = vadd.xlane.f32.xlu0 %v310
  %v312 = vpop.xlane.xlu0 %311
  %v313 = vsel %vm29, %v269, 0.0
  %314 = vadd.xlane.f32.xlu0 %v313
  %v315 = vpop.xlane.xlu0 %314
  %v316 = vsel %vm29, %v270, 0.0
  %317 = vadd.xlane.f32.xlu0 %v316
  %v318 = vpop.xlane.xlu0 %317
  %v319 = vmul.f32 %v273, %v78
  %v320 = vmul.f32 %v276, %v78
  %v321 = vmul.f32 %v279, %v78
  %v322 = vmul.f32 %v282, %v78
  %v323 = vmul.f32 %v285, %v78
  %v324 = vmul.f32 %v288, %v78
  %v325 = vmul.f32 %v291, %v78
  %v326 = vmul.f32 %v294, %v78
  %v327 = vmul.f32 %v297, %v78
  %v328 = vmul.f32 %v300, %v78
  %v329 = vmul.f32 %v303, %v78
  %v330 = vmul.f32 %v306, %v78
  %v331 = vmul.f32 %v309, %v78
  %v332 = vmul.f32 %v312, %v78
  %v333 = vmul.f32 %v315, %v78
  %v334 = vmul.f32 %v318, %v78
  %v335 = vsub.f32 %v255, %v319
  %v336 = vsub.f32 %v256, %v320
  %v337 = vsub.f32 %v257, %v321
  %v338 = vsub.f32 %v258, %v322
  %v339 = vsub.f32 %v259, %v323
  %v340 = vsub.f32 %v260, %v324
  %v341 = vsub.f32 %v261, %v325
  %v342 = vsub.f32 %v262, %v326
  %v343 = vsub.f32 %v263, %v327
  %v344 = vsub.f32 %v264, %v328
  %v345 = vsub.f32 %v265, %v329
  %v346 = vsub.f32 %v266, %v330
  %v347 = vsub.f32 %v267, %v331
  %v348 = vsub.f32 %v268, %v332
  %v349 = vsub.f32 %v269, %v333
  %v350 = vsub.f32 %v270, %v334
  %v351 = vmul.f32 %v335, %v335
  %v352 = vmul.f32 %v336, %v336
  %v353 = vmul.f32 %v337, %v337
  %v354 = vmul.f32 %v338, %v338
  %v355 = vmul.f32 %v339, %v339
  %v356 = vmul.f32 %v340, %v340
  %v357 = vmul.f32 %v341, %v341
  %v358 = vmul.f32 %v342, %v342
  %v359 = vmul.f32 %v343, %v343
  %v360 = vmul.f32 %v344, %v344
  %v361 = vmul.f32 %v345, %v345
  %v362 = vmul.f32 %v346, %v346
  %v363 = vmul.f32 %v347, %v347
  %v364 = vmul.f32 %v348, %v348
  %v365 = vmul.f32 %v349, %v349
  %v366 = vmul.f32 %v350, %v350
  %v367 = vsel %vm29, %v351, 0.0
  %368 = vadd.xlane.f32.xlu0 %v367
  %v369 = vpop.xlane.xlu0 %368
  %v370 = vsel %vm29, %v352, 0.0
  %371 = vadd.xlane.f32.xlu0 %v370
  %v372 = vpop.xlane.xlu0 %371
  %v373 = vsel %vm29, %v353, 0.0
  %374 = vadd.xlane.f32.xlu0 %v373
  %v375 = vpop.xlane.xlu0 %374
  %v376 = vsel %vm29, %v354, 0.0
  %377 = vadd.xlane.f32.xlu0 %v376
  %v378 = vpop.xlane.xlu0 %377
  %v379 = vsel %vm29, %v355, 0.0
  %380 = vadd.xlane.f32.xlu0 %v379
  %v381 = vpop.xlane.xlu0 %380
  %v382 = vsel %vm29, %v356, 0.0
  %383 = vadd.xlane.f32.xlu0 %v382
  %v384 = vpop.xlane.xlu0 %383
  %v385 = vsel %vm29, %v357, 0.0
  %386 = vadd.xlane.f32.xlu0 %v385
  %v387 = vpop.xlane.xlu0 %386
  %v388 = vsel %vm29, %v358, 0.0
  %389 = vadd.xlane.f32.xlu0 %v388
  %v390 = vpop.xlane.xlu0 %389
  %v391 = vsel %vm29, %v359, 0.0
  %392 = vadd.xlane.f32.xlu0 %v391
  %v393 = vpop.xlane.xlu0 %392
  %v394 = vsel %vm29, %v360, 0.0
  %395 = vadd.xlane.f32.xlu0 %v394
  %v396 = vpop.xlane.xlu0 %395
  %v397 = vsel %vm29, %v361, 0.0
  %398 = vadd.xlane.f32.xlu0 %v397
  %v399 = vpop.xlane.xlu0 %398
  %v400 = vsel %vm29, %v362, 0.0
  %401 = vadd.xlane.f32.xlu0 %v400
  %v402 = vpop.xlane.xlu0 %401
  %v403 = vsel %vm29, %v363, 0.0
  %404 = vadd.xlane.f32.xlu0 %v403
  %v405 = vpop.xlane.xlu0 %404
  %v406 = vsel %vm29, %v364, 0.0
  %407 = vadd.xlane.f32.xlu0 %v406
  %v408 = vpop.xlane.xlu0 %407
  %v409 = vsel %vm29, %v365, 0.0
  %410 = vadd.xlane.f32.xlu0 %v409
  %v411 = vpop.xlane.xlu0 %410
  %v412 = vsel %vm29, %v366, 0.0
  %413 = vadd.xlane.f32.xlu0 %v412
  %v414 = vpop.xlane.xlu0 %413
  %v415 = vmul.f32 %v369, %v78
  %v416 = vmul.f32 %v372, %v78
  %v417 = vmul.f32 %v375, %v78
  %v418 = vmul.f32 %v378, %v78
  %v419 = vmul.f32 %v381, %v78
  %v420 = vmul.f32 %v384, %v78
  %v421 = vmul.f32 %v387, %v78
  %v422 = vmul.f32 %v390, %v78
  %v423 = vmul.f32 %v393, %v78
  %v424 = vmul.f32 %v396, %v78
  %v425 = vmul.f32 %v399, %v78
  %v426 = vmul.f32 %v402, %v78
  %v427 = vmul.f32 %v405, %v78
  %v428 = vmul.f32 %v408, %v78
  %v429 = vmul.f32 %v411, %v78
  %v430 = vmul.f32 %v414, %v78
  %v431 = vadd.f32 %v415, 1e-05
  %v432 = vadd.f32 %v416, 1e-05
  %v433 = vadd.f32 %v417, 1e-05
  %v434 = vadd.f32 %v418, 1e-05
  %v435 = vadd.f32 %v419, 1e-05
  %v436 = vadd.f32 %v420, 1e-05
  %v437 = vadd.f32 %v421, 1e-05
  %v438 = vadd.f32 %v422, 1e-05
  %v439 = vadd.f32 %v423, 1e-05
  %v440 = vadd.f32 %v424, 1e-05
  %v441 = vadd.f32 %v425, 1e-05
  %v442 = vadd.f32 %v426, 1e-05
  %v443 = vadd.f32 %v427, 1e-05
  %v444 = vadd.f32 %v428, 1e-05
  %v445 = vadd.f32 %v429, 1e-05
  %v446 = vadd.f32 %v430, 1e-05
  %v447 = vrsqrt.pop %v431
  %v448 = vrsqrt.pop %v432
  %v449 = vrsqrt.pop %v433
  %v450 = vrsqrt.pop %v434
  %v451 = vrsqrt.pop %v435
  %v452 = vrsqrt.pop %v436
  %v453 = vrsqrt.pop %v437
  %v454 = vrsqrt.pop %v438
  %v455 = vrsqrt.pop %v439
  %v456 = vrsqrt.pop %v440
  %v457 = vrsqrt.pop %v441
  %v458 = vrsqrt.pop %v442
  %v459 = vrsqrt.pop %v443
  %v460 = vrsqrt.pop %v444
  %v461 = vrsqrt.pop %v445
  %v462 = vrsqrt.pop %v446
  %v463 = vmul.f32 %v335, %v447
  %v464 = vmul.f32 %v336, %v448
  %v465 = vmul.f32 %v337, %v449
  %v466 = vmul.f32 %v338, %v450
  %v467 = vmul.f32 %v339, %v451
  %v468 = vmul.f32 %v340, %v452
  %v469 = vmul.f32 %v341, %v453
  %v470 = vmul.f32 %v342, %v454
  %v471 = vmul.f32 %v343, %v455
  %v472 = vmul.f32 %v344, %v456
  %v473 = vmul.f32 %v345, %v457
  %v474 = vmul.f32 %v346, %v458
  %v475 = vmul.f32 %v347, %v459
  %v476 = vmul.f32 %v348, %v460
  %v477 = vmul.f32 %v349, %v461
  %v478 = vmul.f32 %v350, %v462
  %479 = vst.msk [vmem:[%s3] sm:$0xff] %vm29, %v463
  %480 = vst.msk [vmem:[%s3 + $0x8] sm:$0xff] %vm29, %v464
  %481 = vst.msk [vmem:[%s3 + $0x10] sm:$0xff] %vm29, %v465
  %482 = vst.msk [vmem:[%s3 + $0x18] sm:$0xff] %vm29, %v466
  %483 = vst.msk [vmem:[%s3 + $0x20] sm:$0xff] %vm29, %v467
  %484 = vst.msk [vmem:[%s3 + $0x28] sm:$0xff] %vm29, %v468
  %485 = vst.msk [vmem:[%s3 + $0x30] sm:$0xff] %vm29, %v469
  %486 = vst.msk [vmem:[%s3 + $0x38] sm:$0xff] %vm29, %v470
  %487 = vst.msk [vmem:[%s3 + $0x40] sm:$0xff] %vm29, %v471
  %488 = vst.msk [vmem:[%s3 + $0x48] sm:$0xff] %vm29, %v472
  %489 = vst.msk [vmem:[%s3 + $0x50] sm:$0xff] %vm29, %v473
  %490 = vst.msk [vmem:[%s3 + $0x58] sm:$0xff] %vm29, %v474
  %491 = vst.msk [vmem:[%s3 + $0x60] sm:$0xff] %vm29, %v475
  %492 = vst.msk [vmem:[%s3 + $0x68] sm:$0xff] %vm29, %v476
  %493 = vst.msk [vmem:[%s3 + $0x70] sm:$0xff] %vm29, %v477
  %494 = vst.msk [vmem:[%s3 + $0x78] sm:$0xff] %vm29, %v478
  // Predicated region
  $region10: #{tpu_custom_call.1} parent=0 // pred_check
    _
  $region11: #{tpu_custom_call.1} parent=0 // pred_check_branch
    %496 = sbr.rel (0) target = $region13
  $region12: #{tpu_custom_call.1} parent=0 // pred_region
    _
  $region13: #{tpu_custom_call.1} parent=0 // pred_fallthru
    _
  // Predicated region
  $region14: #{tpu_custom_call.1} parent=0 // pred_check
    _
  $region15: #{tpu_custom_call.1} parent=0 // pred_check_branch
    %498 = sbr.rel (0) target = $region17
  $region16: #{tpu_custom_call.1} parent=0 // pred_region
    _
  $region17: #{tpu_custom_call.1} parent=0 // pred_fallthru
    _
  // Predicated region
  $region18: #{tpu_custom_call.1} parent=0 // pred_check
    _
  $region19: #{tpu_custom_call.1} parent=0 // pred_check_branch
    %500 = sbr.rel (0) target = $region21
  $region20: #{tpu_custom_call.1} parent=0 // pred_region
    _
  $region21: #{tpu_custom_call.1} parent=0 // pred_fallthru
    _
  // Predicated region
  $region22: #{tpu_custom_call.1} parent=0 // pred_check
    _
  $region23: #{tpu_custom_call.1} parent=0 // pred_check_branch
    %502 = sbr.rel (0) target = $region25
  $region24: #{tpu_custom_call.1} parent=0 // pred_region
    _
  $region25: #{tpu_custom_call.1} parent=0 // pred_fallthru
    _

</llo_original>
